<compile_context>
chip_gen: v7x
topology: tpu7x:2x2x1
jax: 0.10.0
libtpu: 0.0.40
codegen_flags: <defaults>
</compile_context>

<pallas_src>
import jax
import jax.numpy as jnp
from jax.experimental import pallas as pl
from jax.experimental.pallas import tpu as pltpu

HIDDEN_PAD = 128  # all hidden widths padded to 128 lanes


def dql_kernel(x_ref, w1_ref, b1_ref, w2_ref, b2_ref, w3_ref, b3_ref,
               w4_ref, b4_ref, o_ref):
    """Fused MLP: (Linear+ReLU) x3 -> Linear -> Softmax over the lane axis."""
    # Layer 1: in -> 128, ReLU.  x is already bf16 (cast in the wrapper);
    # matmuls run bf16 operands on the MXU with f32 accumulation.
    x = x_ref[...]
    h = jnp.dot(x, w1_ref[...], preferred_element_type=jnp.float32) + b1_ref[...]
    h = jnp.maximum(h, 0.0)

    # Layer 2: 128 -> 128 (zero-padded from 64), ReLU
    h = jnp.dot(h.astype(jnp.bfloat16), w2_ref[...],
                preferred_element_type=jnp.float32) + b2_ref[...]
    h = jnp.maximum(h, 0.0)

    # Layer 3: 128 -> 128 (zero-padded from 32), ReLU
    h = jnp.dot(h.astype(jnp.bfloat16), w3_ref[...],
                preferred_element_type=jnp.float32) + b3_ref[...]
    h = jnp.maximum(h, 0.0)

    # Layer 4: 128 -> out_pad logits.  Padded output lanes have zero weight
    # columns and bias = -1e30 (added in f32, after the accumulate), so they
    # contribute exp(...) == 0 below.
    logits = jnp.dot(h.astype(jnp.bfloat16), w4_ref[...],
                     preferred_element_type=jnp.float32) + b4_ref[...]

    # Numerically stable softmax over the (lane-dense, padded) last axis.
    # Exact divide so rows sum to 1 up to output-dtype rounding.
    m = jnp.max(logits, axis=-1, keepdims=True)
    e = jnp.exp(logits - m)
    s = jnp.sum(e, axis=-1, keepdims=True)
    o_ref[...] = (e / s).astype(o_ref.dtype)


def _choose_batch_tile(B, max_tile=1024):
    """Pick the batch tile.

    Goals (in priority order):
      * tile <= B // 2 so grid >= 2 and v7x's two TensorCores both get work,
      * as large as possible (amortize ~0.35 us/step; fill the MXU rows),
        preferring multiples of 256 / 128 / 16 (16 keeps bf16 sublane packing
        aligned; 128/256 match v5e / v6e+v7x MXU heights),
      * divide B exactly so the wrapper never has to jnp.pad the input.
    VMEM is a non-issue: even tile=1024 double-buffered is a few MiB.
    """
    if B < 32:
        # Single full-batch tile; block dim == array dim is always legal.
        return B
    cap = max(16, min(max_tile, B // 2))
    for step in (256, 128, 16):
        t = (cap // step) * step
        while t >= step:
            if B % t == 0:
                return t
            t -= step
    # No exact divisor found: largest 16-aligned tile; wrapper pads the batch.
    return max(16, (cap // 16) * 16)


def dql_forward(x, kparams, output_size, *, batch_tile=None):
    """Run the fused DQL forward pass.

    x:        [B, input_size] float32 (cast to bf16 for the kernel)
    kparams:  kernel (padded / bf16) params from pad_params_for_kernel().
    Returns:  [B, output_size] float32 softmax probabilities.
    """
    B, in_size = x.shape
    out_pad = kparams["w4"].shape[1]

    if batch_tile is None:
        batch_tile = _choose_batch_tile(B)

    # Cast the input once in the wrapper: the kernel uses bf16 matmul operands
    # anyway, and this halves the x HBM -> VMEM DMA bytes.
    xb = x.astype(jnp.bfloat16)

    # Pad the batch only if no dividing tile was found (extra rows sliced off).
    Bp = ((B + batch_tile - 1) // batch_tile) * batch_tile
    if Bp != B:
        xb = jnp.pad(xb, ((0, Bp - B), (0, 0)))

    grid = (Bp // batch_tile,)

    def rep(shape):
        # Constant index_map -> Pallas skips re-DMA of these across grid steps.
        # (pipeline_mode=pl.Buffered(1) would also drop the second buffer, but
        # the weights are ~100 KiB total, so it's a marginal win here.)
        return pl.BlockSpec(shape, lambda i: (0, 0))

    in_specs = [
        pl.BlockSpec((batch_tile, in_size), lambda i: (i, 0)),
        rep(kparams["w1"].shape), rep(kparams["b1"].shape),
        rep(kparams["w2"].shape), rep(kparams["b2"].shape),
        rep(kparams["w3"].shape), rep(kparams["b3"].shape),
        rep(kparams["w4"].shape), rep(kparams["b4"].shape),
    ]
    out_specs = pl.BlockSpec((batch_tile, out_pad), lambda i: (i, 0))

    # bf16 padded output: halves writeback + the wrapper's slice read.
    out = pl.pallas_call(
        dql_kernel,
        out_shape=jax.ShapeDtypeStruct((Bp, out_pad), jnp.bfloat16),
        grid=grid,
        in_specs=in_specs,
        out_specs=out_specs,
        compiler_params=pltpu.CompilerParams(
            dimension_semantics=("parallel",)),
    )(xb, kparams["w1"], kparams["b1"], kparams["w2"], kparams["b2"],
      kparams["w3"], kparams["b3"], kparams["w4"], kparams["b4"])

    return out[:B, :output_size].astype(jnp.float32)


def init_params(key, input_size, output_size):
    """PyTorch nn.Linear-style init: U(-1/sqrt(fan_in), +1/sqrt(fan_in)).

    Weights stored [in_features, out_features] (pre-transposed vs PyTorch).
    """
    sizes = [(input_size, 128), (128, 64), (64, 32), (32, output_size)]
    params = {}
    keys = jax.random.split(key, 2 * len(sizes))
    for idx, (fan_in, fan_out) in enumerate(sizes):
        bound = 1.0 / jnp.sqrt(jnp.float32(fan_in))
        w = jax.random.uniform(keys[2 * idx], (fan_in, fan_out),
                               minval=-bound, maxval=bound, dtype=jnp.float32)
        b = jax.random.uniform(keys[2 * idx + 1], (1, fan_out),
                               minval=-bound, maxval=bound, dtype=jnp.float32)
        params[f"w{idx + 1}"] = w
        params[f"b{idx + 1}"] = b
    return params


def pad_params_for_kernel(params, output_size):
    """Pad hidden/output widths to 128 lanes and cast weights to bf16.

    Zero-padded hidden lanes stay exactly zero through ReLU, so results are
    unchanged.  Padded output-lane biases are set to -1e30 (kept in f32, added
    after the f32 accumulate) so they vanish under softmax.
    """
    def pad2(a, rows, cols):
        r, c = a.shape
        return jnp.pad(a, ((0, rows - r), (0, cols - c)))

    out_pad = ((output_size + 127) // 128) * 128

    kp = {}
    kp["w1"] = params["w1"].astype(jnp.bfloat16)                       # (in, 128)
    kp["b1"] = params["b1"]                                            # (1, 128) f32
    kp["w2"] = pad2(params["w2"], 128, HIDDEN_PAD).astype(jnp.bfloat16)
    kp["b2"] = pad2(params["b2"], 1, HIDDEN_PAD)
    kp["w3"] = pad2(params["w3"], HIDDEN_PAD, HIDDEN_PAD).astype(jnp.bfloat16)
    kp["b3"] = pad2(params["b3"], 1, HIDDEN_PAD)
    kp["w4"] = pad2(params["w4"], HIDDEN_PAD, out_pad).astype(jnp.bfloat16)
    b4 = jnp.full((1, out_pad), -1e30, dtype=jnp.float32)
    b4 = b4.at[:, :output_size].set(params["b4"][0])
    kp["b4"] = b4
    return kp


def dql_reference_f32(x, params):
    """Pure-JAX f32 reference of the original PyTorch forward pass."""
    h = jnp.maximum(x @ params["w1"] + params["b1"], 0.0)
    h = jnp.maximum(h @ params["w2"] + params["b2"], 0.0)
    h = jnp.maximum(h @ params["w3"] + params["b3"], 0.0)
    logits = h @ params["w4"] + params["b4"]
    return jax.nn.softmax(logits, axis=1)


def dql_reference_bf16(x, params):
    """Reference emulating the kernel's bf16 matmul operands (f32 accum)."""
    bf = lambda a: a.astype(jnp.bfloat16)
    h = jnp.maximum(jnp.dot(bf(x), bf(params["w1"]),
                            preferred_element_type=jnp.float32) + params["b1"], 0.0)
    h = jnp.maximum(jnp.dot(bf(h), bf(params["w2"]),
                            preferred_element_type=jnp.float32) + params["b2"], 0.0)
    h = jnp.maximum(jnp.dot(bf(h), bf(params["w3"]),
                            preferred_element_type=jnp.float32) + params["b3"], 0.0)
    logits = jnp.dot(bf(h), bf(params["w4"]),
                     preferred_element_type=jnp.float32) + params["b4"]
    return jax.nn.softmax(logits, axis=1)


if __name__ == "__main__":
    key = jax.random.PRNGKey(0)
    k_param, k_x = jax.random.split(key)

    batch, input_size, output_size = 32, 32, 4
    params = init_params(k_param, input_size, output_size)
    kparams = pad_params_for_kernel(params, output_size)
    x = jax.random.normal(k_x, (batch, input_size), dtype=jnp.float32)

    # Auto tile -> 16 here: grid=(2,), no input padding, bf16-aligned blocks;
    # large batches pick 128/256/1024-row tiles automatically.
    out = dql_forward(x, kparams, output_size)
    out = jax.block_until_ready(out)

    ref_bf16 = dql_reference_bf16(x, params)
    ref_f32 = dql_reference_f32(x, params)

    assert out.shape == (batch, output_size)
    # Check vs a reference using the same bf16 matmul operands (output is bf16,
    # so tolerance covers bf16 rounding of probabilities <= 1).
    assert jnp.allclose(out, ref_bf16, atol=1e-2, rtol=1e-2), "mismatch vs bf16 ref"
    # Looser sanity check vs the pure f32 PyTorch-equivalent reference.
    assert jnp.allclose(out, ref_f32, atol=5e-2), "mismatch vs f32 ref"
    # Rows of a softmax sum to ~1 (exact divide; slack is bf16 output rounding).
    assert jnp.allclose(jnp.sum(out, axis=1), 1.0, atol=2e-2)

    print("KERNEL_OK")
</pallas_src>

<mosaic_0001>
module attributes {stable_mosaic.version = 11 : i64} {
  func.func @dql_kernel(%arg0: i32, %arg1: memref<16x32xbf16, #tpu.memory_space<vmem>>, %arg2: memref<32x128xbf16, #tpu.memory_space<vmem>>, %arg3: memref<1x128xf32, #tpu.memory_space<vmem>>, %arg4: memref<128x128xbf16, #tpu.memory_space<vmem>>, %arg5: memref<1x128xf32, #tpu.memory_space<vmem>>, %arg6: memref<128x128xbf16, #tpu.memory_space<vmem>>, %arg7: memref<1x128xf32, #tpu.memory_space<vmem>>, %arg8: memref<128x128xbf16, #tpu.memory_space<vmem>>, %arg9: memref<1x128xf32, #tpu.memory_space<vmem>>, %arg10: memref<16x128xbf16, #tpu.memory_space<vmem>>) attributes {dimension_semantics = [#tpu.dimension_semantics<parallel>], iteration_bounds = array<i64: 2>, scalar_prefetch = 0 : i64, scratch_operands = 0 : i64, tpu.core_type = #tpu.core_type<tc>, window_params = [{transform_indices = @transform_0, window_bounds = array<i64: 16, 32>}, {pipeline_mode = #tpu.pipeline_mode<synchronous>, transform_indices = @transform_1, window_bounds = array<i64: 32, 128>}, {pipeline_mode = #tpu.pipeline_mode<synchronous>, transform_indices = @transform_2, window_bounds = array<i64: 1, 128>}, {pipeline_mode = #tpu.pipeline_mode<synchronous>, transform_indices = @transform_3, window_bounds = array<i64: 128, 128>}, {pipeline_mode = #tpu.pipeline_mode<synchronous>, transform_indices = @transform_4, window_bounds = array<i64: 1, 128>}, {pipeline_mode = #tpu.pipeline_mode<synchronous>, transform_indices = @transform_5, window_bounds = array<i64: 128, 128>}, {pipeline_mode = #tpu.pipeline_mode<synchronous>, transform_indices = @transform_6, window_bounds = array<i64: 1, 128>}, {pipeline_mode = #tpu.pipeline_mode<synchronous>, transform_indices = @transform_7, window_bounds = array<i64: 128, 128>}, {pipeline_mode = #tpu.pipeline_mode<synchronous>, transform_indices = @transform_8, window_bounds = array<i64: 1, 128>}, {transform_indices = @transform_9, window_bounds = array<i64: 16, 128>}]} {
    %c0 = arith.constant 0 : index
    %c0_0 = arith.constant 0 : index
    %0 = vector.load %arg1[%c0, %c0_0] : memref<16x32xbf16, #tpu.memory_space<vmem>>, vector<16x32xbf16>
    %c0_1 = arith.constant 0 : index
    %c0_2 = arith.constant 0 : index
    %1 = vector.load %arg2[%c0_1, %c0_2] : memref<32x128xbf16, #tpu.memory_space<vmem>>, vector<32x128xbf16>
    %cst = arith.constant dense<0.000000e+00> : vector<16x128xf32>
    %2 = tpu.matmul %0, %1, %cst {dimension_numbers = #tpu.dot_dimension_numbers<[1], [0], [0], [1], [0, 0, 1, 1], [], []>} : vector<16x32xbf16>, vector<32x128xbf16>, vector<16x128xf32> -> vector<16x128xf32>
    %c0_3 = arith.constant 0 : index
    %c0_4 = arith.constant 0 : index
    %3 = vector.load %arg3[%c0_3, %c0_4] : memref<1x128xf32, #tpu.memory_space<vmem>>, vector<1x128xf32>
    %4 = vector.broadcast %3 : vector<1x128xf32> to vector<16x128xf32>
    %5 = arith.addf %2, %4 : vector<16x128xf32>
    %cst_5 = arith.constant 0.000000e+00 : f32
    %6 = vector.broadcast %cst_5 : f32 to vector<16x128xf32>
    %7 = arith.maximumf %5, %6 : vector<16x128xf32>
    %8 = arith.truncf %7 : vector<16x128xf32> to vector<16x128xbf16>
    %c0_6 = arith.constant 0 : index
    %c0_7 = arith.constant 0 : index
    %9 = vector.load %arg4[%c0_6, %c0_7] : memref<128x128xbf16, #tpu.memory_space<vmem>>, vector<128x128xbf16>
    %cst_8 = arith.constant dense<0.000000e+00> : vector<16x128xf32>
    %10 = tpu.matmul %8, %9, %cst_8 {dimension_numbers = #tpu.dot_dimension_numbers<[1], [0], [0], [1], [0, 0, 1, 1], [], []>} : vector<16x128xbf16>, vector<128x128xbf16>, vector<16x128xf32> -> vector<16x128xf32>
    %c0_9 = arith.constant 0 : index
    %c0_10 = arith.constant 0 : index
    %11 = vector.load %arg5[%c0_9, %c0_10] : memref<1x128xf32, #tpu.memory_space<vmem>>, vector<1x128xf32>
    %12 = vector.broadcast %11 : vector<1x128xf32> to vector<16x128xf32>
    %13 = arith.addf %10, %12 : vector<16x128xf32>
    %cst_11 = arith.constant 0.000000e+00 : f32
    %14 = vector.broadcast %cst_11 : f32 to vector<16x128xf32>
    %15 = arith.maximumf %13, %14 : vector<16x128xf32>
    %16 = arith.truncf %15 : vector<16x128xf32> to vector<16x128xbf16>
    %c0_12 = arith.constant 0 : index
    %c0_13 = arith.constant 0 : index
    %17 = vector.load %arg6[%c0_12, %c0_13] : memref<128x128xbf16, #tpu.memory_space<vmem>>, vector<128x128xbf16>
    %cst_14 = arith.constant dense<0.000000e+00> : vector<16x128xf32>
    %18 = tpu.matmul %16, %17, %cst_14 {dimension_numbers = #tpu.dot_dimension_numbers<[1], [0], [0], [1], [0, 0, 1, 1], [], []>} : vector<16x128xbf16>, vector<128x128xbf16>, vector<16x128xf32> -> vector<16x128xf32>
    %c0_15 = arith.constant 0 : index
    %c0_16 = arith.constant 0 : index
    %19 = vector.load %arg7[%c0_15, %c0_16] : memref<1x128xf32, #tpu.memory_space<vmem>>, vector<1x128xf32>
    %20 = vector.broadcast %19 : vector<1x128xf32> to vector<16x128xf32>
    %21 = arith.addf %18, %20 : vector<16x128xf32>
    %cst_17 = arith.constant 0.000000e+00 : f32
    %22 = vector.broadcast %cst_17 : f32 to vector<16x128xf32>
    %23 = arith.maximumf %21, %22 : vector<16x128xf32>
    %24 = arith.truncf %23 : vector<16x128xf32> to vector<16x128xbf16>
    %c0_18 = arith.constant 0 : index
    %c0_19 = arith.constant 0 : index
    %25 = vector.load %arg8[%c0_18, %c0_19] : memref<128x128xbf16, #tpu.memory_space<vmem>>, vector<128x128xbf16>
    %cst_20 = arith.constant dense<0.000000e+00> : vector<16x128xf32>
    %26 = tpu.matmul %24, %25, %cst_20 {dimension_numbers = #tpu.dot_dimension_numbers<[1], [0], [0], [1], [0, 0, 1, 1], [], []>} : vector<16x128xbf16>, vector<128x128xbf16>, vector<16x128xf32> -> vector<16x128xf32>
    %c0_21 = arith.constant 0 : index
    %c0_22 = arith.constant 0 : index
    %27 = vector.load %arg9[%c0_21, %c0_22] : memref<1x128xf32, #tpu.memory_space<vmem>>, vector<1x128xf32>
    %28 = vector.broadcast %27 : vector<1x128xf32> to vector<16x128xf32>
    %29 = arith.addf %26, %28 : vector<16x128xf32>
    %cst_23 = arith.constant dense<0xFF800000> : vector<16xf32>
    %30 = vector.multi_reduction <maximumf>, %29, %cst_23 [1] : vector<16x128xf32> to vector<16xf32>
    %31 = vector.shape_cast %30 : vector<16xf32> to vector<16x1xf32>
    %32 = vector.broadcast %31 : vector<16x1xf32> to vector<16x128xf32>
    %33 = arith.subf %29, %32 : vector<16x128xf32>
    %34 = math.exp %33 : vector<16x128xf32>
    %cst_24 = arith.constant dense<0.000000e+00> : vector<16xf32>
    %35 = vector.multi_reduction <add>, %34, %cst_24 [1] : vector<16x128xf32> to vector<16xf32>
    %36 = vector.shape_cast %35 : vector<16xf32> to vector<16x1xf32>
    %37 = vector.broadcast %36 : vector<16x1xf32> to vector<16x128xf32>
    %38 = arith.divf %34, %37 : vector<16x128xf32>
    %39 = arith.truncf %38 : vector<16x128xf32> to vector<16x128xbf16>
    %c0_25 = arith.constant 0 : index
    %c0_26 = arith.constant 0 : index
    %40 = vector.load %arg10[%c0_25, %c0_26] : memref<16x128xbf16, #tpu.memory_space<vmem>>, vector<16x128xbf16>
    tpu.vector_store %arg10[%c0_25, %c0_26], %39 {strides = array<i32>} : memref<16x128xbf16, #tpu.memory_space<vmem>>, vector<16x128xbf16>,
    return
  }
  func.func @transform_0(%arg0: i32) -> (i32, i32) {
    %c0_i32 = arith.constant 0 : i32
    %c0_i32_0 = arith.constant 0 : i32
    return %arg0, %c0_i32 : i32, i32
  }
  func.func @transform_1(%arg0: i32) -> (i32, i32) {
    %c0_i32 = arith.constant 0 : i32
    %c0_i32_0 = arith.constant 0 : i32
    %c0_i32_1 = arith.constant 0 : i32
    return %c0_i32, %c0_i32_0 : i32, i32
  }
  func.func @transform_2(%arg0: i32) -> (i32, i32) {
    %c0_i32 = arith.constant 0 : i32
    %c0_i32_0 = arith.constant 0 : i32
    %c0_i32_1 = arith.constant 0 : i32
    return %c0_i32, %c0_i32_0 : i32, i32
  }
  func.func @transform_3(%arg0: i32) -> (i32, i32) {
    %c0_i32 = arith.constant 0 : i32
    %c0_i32_0 = arith.constant 0 : i32
    %c0_i32_1 = arith.constant 0 : i32
    return %c0_i32, %c0_i32_0 : i32, i32
  }
  func.func @transform_4(%arg0: i32) -> (i32, i32) {
    %c0_i32 = arith.constant 0 : i32
    %c0_i32_0 = arith.constant 0 : i32
    %c0_i32_1 = arith.constant 0 : i32
    return %c0_i32, %c0_i32_0 : i32, i32
  }
  func.func @transform_5(%arg0: i32) -> (i32, i32) {
    %c0_i32 = arith.constant 0 : i32
    %c0_i32_0 = arith.constant 0 : i32
    %c0_i32_1 = arith.constant 0 : i32
    return %c0_i32, %c0_i32_0 : i32, i32
  }
  func.func @transform_6(%arg0: i32) -> (i32, i32) {
    %c0_i32 = arith.constant 0 : i32
    %c0_i32_0 = arith.constant 0 : i32
    %c0_i32_1 = arith.constant 0 : i32
    return %c0_i32, %c0_i32_0 : i32, i32
  }
  func.func @transform_7(%arg0: i32) -> (i32, i32) {
    %c0_i32 = arith.constant 0 : i32
    %c0_i32_0 = arith.constant 0 : i32
    %c0_i32_1 = arith.constant 0 : i32
    return %c0_i32, %c0_i32_0 : i32, i32
  }
  func.func @transform_8(%arg0: i32) -> (i32, i32) {
    %c0_i32 = arith.constant 0 : i32
    %c0_i32_0 = arith.constant 0 : i32
    %c0_i32_1 = arith.constant 0 : i32
    return %c0_i32, %c0_i32_0 : i32, i32
  }
  func.func @transform_9(%arg0: i32) -> (i32, i32) {
    %c0_i32 = arith.constant 0 : i32
    %c0_i32_0 = arith.constant 0 : i32
    return %arg0, %c0_i32 : i32, i32
  }
}

</mosaic_0001>

<llo_original>
// kernel: tpu_custom_call.1
$region0: #{tpu_custom_call.1}
  #allocation0 [shape = 'u32[]', space=smem, size = 0x4, offset = 0x4, fixed_abs, tag = 'smem constant byte address 0x4 - core index']
  #allocation1 [shape = 'u32[144,128]{1,0:T(1,128)}', space=vmem, size = 0x12000, scoped, tag = 'internal scratch']
  %s0 = inlined_call_operand.hbm [shape: bf16[32,32], index: 0, kind: input, shape index: {}]
  %s1 = inlined_call_operand.hbm [shape: bf16[32,128], index: 1, kind: input, shape index: {}]
  %s2 = inlined_call_operand.vmem [shape: f32[1,128], index: 2, kind: input, shape index: {}]
  %s3 = inlined_call_operand.hbm [shape: bf16[128,128], index: 3, kind: input, shape index: {}]
  %s4 = inlined_call_operand.vmem [shape: f32[1,128], index: 4, kind: input, shape index: {}]
  %s5 = inlined_call_operand.hbm [shape: bf16[128,128], index: 5, kind: input, shape index: {}]
  %s6 = inlined_call_operand.vmem [shape: f32[1,128], index: 6, kind: input, shape index: {}]
  %s7 = inlined_call_operand.hbm [shape: bf16[128,128], index: 7, kind: input, shape index: {}]
  %s8 = inlined_call_operand.vmem [shape: f32[1,128], index: 8, kind: input, shape index: {}]
  %s9 = inlined_call_operand.hbm [shape: bf16[32,128], index: 9, kind: output, shape index: {}]
  %s10 = sld [smem:[#allocation0]]
  $region89: #{tpu_custom_call.1} parent=0
    _
  %s12 = ssub.s32 1, %s10
  %s13 = scalar_select 0, %s12, %s10
  $region1: #{tpu_custom_call.1} parent=0
    #allocation2 [shape = 'u8[8192]{0}', space=vmem, size = 0x2000, scoped, tag = 'input window, operand 0']
    #allocation3 [shape = 's32[2]{0}', space=sflag, size = 0x8, scoped, tag = 'scoped memory for tpu_custom_call.1']
    #allocation4 [shape = 's32[2]{0}', space=sflag, size = 0x8, scoped, tag = 'scoped memory for tpu_custom_call.1']
    #allocation5 [shape = 'u8[8192]{0}', space=vmem, size = 0x2000, scoped, tag = 'input window, operand 1, single buffered']
    #allocation6 [shape = 's32[1]{0}', space=sflag, size = 0x4, scoped, tag = 'scoped memory for tpu_custom_call.1']
    #allocation7 [shape = 'u8[32768]{0}', space=vmem, size = 0x8000, scoped, tag = 'input window, operand 3, single buffered']
    #allocation8 [shape = 'u8[32768]{0}', space=vmem, size = 0x8000, scoped, tag = 'input window, operand 5, single buffered']
    #allocation9 [shape = 's32[1]{0}', space=sflag, size = 0x4, scoped, tag = 'scoped memory for tpu_custom_call.1']
    #allocation10 [shape = 'u8[32768]{0}', space=vmem, size = 0x8000, scoped, tag = 'input window, operand 7, single buffered']
    #allocation11 [shape = 'u8[8192]{0}', space=vmem, size = 0x2000, scoped, tag = 'output window, operand 0']
    %14 = vsyncpa [#allocation3], 0
    %s15 = scalar_lea.sflag [#allocation3], 1
    %16 = vsyncpa %s15, 0
    %17 = vsyncpa [#allocation6], 0
    %18 = vsyncpa [#allocation9], 0
    %19 = vsyncpa [#allocation4], 0
    %s20 = scalar_lea.sflag [#allocation4], 1
    %21 = vsyncpa %s20, 0
    loop: start=0, step=1, limit=4
    $region2: #{tpu_custom_call.1} parent=1 // loop_pre_header
      _
    $region3: #{tpu_custom_call.1} parent=1 // loop_header
      %s23 = sphi 0, %s27
      %p24 = scmp.ge.s32.totalorder %s23, 4
      %s33 = sphi 0, %s35
      %s36 = sphi 0, %s33
      %s37 = sphi 0, %s36
      %s53 = sphi 0, %s37
      %s57 = sphi 0, %s57
      %s59 = sphi 0, %s57
      %s60 = sphi 0, %s59
      %s74 = sphi 0, %s60
      %s78 = sphi 0, %s78
      %s80 = sphi 0, %s78
      %s81 = sphi 0, %s80
      %s95 = sphi 0, %s81
      %s99 = sphi 0, %s99
      %s101 = sphi 0, %s99
      %s102 = sphi 0, %s101
      %s116 = sphi 0, %s102
      %s120 = sphi 0, %s120
      %s122 = sphi 0, %s120
      %s123 = sphi 0, %s122
      %s137 = sphi 0, %s123
      %s141 = sphi 0, %s141
      %s143 = sphi 0, %s141
      %s144 = sphi 0, %s143
      %s158 = sphi 0, %s144
      %s162 = sphi 0, %s162
      %s164 = sphi 0, %s162
      %s165 = sphi 0, %s164
      %s179 = sphi 0, %s165
      %s183 = sphi 0, %s183
      %s185 = sphi 0, %s183
      %s186 = sphi 0, %s185
      %s200 = sphi 0, %s186
      %s204 = sphi 0, %s204
      %s206 = sphi 0, %s204
      %s207 = sphi 0, %s206
      %s221 = sphi 0, %s207
      %s227 = sphi 0, %s229
      %s230 = sphi 0, %s227
      %s231 = sphi 0, %s230
      %s247 = sphi 0, %s231
    $region4: #{tpu_custom_call.1} parent=1 // loop_header_branch
      %26 = sbr.rel (%p24) target = $region8
    $region5: #{tpu_custom_call.1} parent=1 // loop_body
      %s28 = ssub.s32 %s23, 1
      %s29 = ssub.s32 %s23, 2
      %s30 = sadd.s32 %s23, 1
      %s31 = ssub.s32 %s23, %s30
      %p32 = scmp.eq.s32.totalorder %s31, 0
      %s34 = sadd.s32 %s33, 1
      %s35 = scalar_select %p32, %s33, %s34
      %p38 = pneg %p32
      %p39 = scmp.eq.s32.totalorder %s23, 1
      %p40 = por %p38, %p39
      %p41 = scmp.ne.s32.totalorder %s33, %s36
      %p42 = scmp.eq.s32.totalorder %s23, 0
      %p43 = por %p41, %p42
      %p44 = scmp.ne.s32.totalorder %s33, %s36
      %p45 = scmp.eq.s32.totalorder %s28, 1
      %p46 = por %p44, %p45
      %p47 = scmp.ne.s32.totalorder %s36, %s37
      %p48 = scmp.eq.s32.totalorder %s28, 0
      %p49 = por %p47, %p48
      %p50 = scmp.ne.s32.totalorder %s36, %s37
      %p51 = scmp.eq.s32.totalorder %s29, 1
      %p52 = por %p50, %p51
      %p54 = scmp.ne.s32.totalorder %s37, %s53
      %p55 = scmp.eq.s32.totalorder %s29, 0
      %p56 = por %p54, %p55
      %s58 = sadd.s32 %s57, 1
      %p61 = scmp.eq.s32.totalorder %s23, 1
      %p62 = scmp.ne.s32.totalorder %s57, %s59
      %p63 = scmp.eq.s32.totalorder %s23, 0
      %p64 = por %p62, %p63
      %p65 = scmp.ne.s32.totalorder %s57, %s59
      %p66 = scmp.eq.s32.totalorder %s28, 1
      %p67 = por %p65, %p66
      %p68 = scmp.ne.s32.totalorder %s59, %s60
      %p69 = scmp.eq.s32.totalorder %s28, 0
      %p70 = por %p68, %p69
      %p71 = scmp.ne.s32.totalorder %s59, %s60
      %p72 = scmp.eq.s32.totalorder %s29, 1
      %p73 = por %p71, %p72
      %p75 = scmp.ne.s32.totalorder %s60, %s74
      %p76 = scmp.eq.s32.totalorder %s29, 0
      %p77 = por %p75, %p76
      %s79 = sadd.s32 %s78, 1
      %p82 = scmp.eq.s32.totalorder %s23, 1
      %p83 = scmp.ne.s32.totalorder %s78, %s80
      %p84 = scmp.eq.s32.totalorder %s23, 0
      %p85 = por %p83, %p84
      %p86 = scmp.ne.s32.totalorder %s78, %s80
      %p87 = scmp.eq.s32.totalorder %s28, 1
      %p88 = por %p86, %p87
      %p89 = scmp.ne.s32.totalorder %s80, %s81
      %p90 = scmp.eq.s32.totalorder %s28, 0
      %p91 = por %p89, %p90
      %p92 = scmp.ne.s32.totalorder %s80, %s81
      %p93 = scmp.eq.s32.totalorder %s29, 1
      %p94 = por %p92, %p93
      %p96 = scmp.ne.s32.totalorder %s81, %s95
      %p97 = scmp.eq.s32.totalorder %s29, 0
      %p98 = por %p96, %p97
      %s100 = sadd.s32 %s99, 1
      %p103 = scmp.eq.s32.totalorder %s23, 1
      %p104 = scmp.ne.s32.totalorder %s99, %s101
      %p105 = scmp.eq.s32.totalorder %s23, 0
      %p106 = por %p104, %p105
      %p107 = scmp.ne.s32.totalorder %s99, %s101
      %p108 = scmp.eq.s32.totalorder %s28, 1
      %p109 = por %p107, %p108
      %p110 = scmp.ne.s32.totalorder %s101, %s102
      %p111 = scmp.eq.s32.totalorder %s28, 0
      %p112 = por %p110, %p111
      %p113 = scmp.ne.s32.totalorder %s101, %s102
      %p114 = scmp.eq.s32.totalorder %s29, 1
      %p115 = por %p113, %p114
      %p117 = scmp.ne.s32.totalorder %s102, %s116
      %p118 = scmp.eq.s32.totalorder %s29, 0
      %p119 = por %p117, %p118
      %s121 = sadd.s32 %s120, 1
      %p124 = scmp.eq.s32.totalorder %s23, 1
      %p125 = scmp.ne.s32.totalorder %s120, %s122
      %p126 = scmp.eq.s32.totalorder %s23, 0
      %p127 = por %p125, %p126
      %p128 = scmp.ne.s32.totalorder %s120, %s122
      %p129 = scmp.eq.s32.totalorder %s28, 1
      %p130 = por %p128, %p129
      %p131 = scmp.ne.s32.totalorder %s122, %s123
      %p132 = scmp.eq.s32.totalorder %s28, 0
      %p133 = por %p131, %p132
      %p134 = scmp.ne.s32.totalorder %s122, %s123
      %p135 = scmp.eq.s32.totalorder %s29, 1
      %p136 = por %p134, %p135
      %p138 = scmp.ne.s32.totalorder %s123, %s137
      %p139 = scmp.eq.s32.totalorder %s29, 0
      %p140 = por %p138, %p139
      %s142 = sadd.s32 %s141, 1
      %p145 = scmp.eq.s32.totalorder %s23, 1
      %p146 = scmp.ne.s32.totalorder %s141, %s143
      %p147 = scmp.eq.s32.totalorder %s23, 0
      %p148 = por %p146, %p147
      %p149 = scmp.ne.s32.totalorder %s141, %s143
      %p150 = scmp.eq.s32.totalorder %s28, 1
      %p151 = por %p149, %p150
      %p152 = scmp.ne.s32.totalorder %s143, %s144
      %p153 = scmp.eq.s32.totalorder %s28, 0
      %p154 = por %p152, %p153
      %p155 = scmp.ne.s32.totalorder %s143, %s144
      %p156 = scmp.eq.s32.totalorder %s29, 1
      %p157 = por %p155, %p156
      %p159 = scmp.ne.s32.totalorder %s144, %s158
      %p160 = scmp.eq.s32.totalorder %s29, 0
      %p161 = por %p159, %p160
      %s163 = sadd.s32 %s162, 1
      %p166 = scmp.eq.s32.totalorder %s23, 1
      %p167 = scmp.ne.s32.totalorder %s162, %s164
      %p168 = scmp.eq.s32.totalorder %s23, 0
      %p169 = por %p167, %p168
      %p170 = scmp.ne.s32.totalorder %s162, %s164
      %p171 = scmp.eq.s32.totalorder %s28, 1
      %p172 = por %p170, %p171
      %p173 = scmp.ne.s32.totalorder %s164, %s165
      %p174 = scmp.eq.s32.totalorder %s28, 0
      %p175 = por %p173, %p174
      %p176 = scmp.ne.s32.totalorder %s164, %s165
      %p177 = scmp.eq.s32.totalorder %s29, 1
      %p178 = por %p176, %p177
      %p180 = scmp.ne.s32.totalorder %s165, %s179
      %p181 = scmp.eq.s32.totalorder %s29, 0
      %p182 = por %p180, %p181
      %s184 = sadd.s32 %s183, 1
      %p187 = scmp.eq.s32.totalorder %s23, 1
      %p188 = scmp.ne.s32.totalorder %s183, %s185
      %p189 = scmp.eq.s32.totalorder %s23, 0
      %p190 = por %p188, %p189
      %p191 = scmp.ne.s32.totalorder %s183, %s185
      %p192 = scmp.eq.s32.totalorder %s28, 1
      %p193 = por %p191, %p192
      %p194 = scmp.ne.s32.totalorder %s185, %s186
      %p195 = scmp.eq.s32.totalorder %s28, 0
      %p196 = por %p194, %p195
      %p197 = scmp.ne.s32.totalorder %s185, %s186
      %p198 = scmp.eq.s32.totalorder %s29, 1
      %p199 = por %p197, %p198
      %p201 = scmp.ne.s32.totalorder %s186, %s200
      %p202 = scmp.eq.s32.totalorder %s29, 0
      %p203 = por %p201, %p202
      %s205 = sadd.s32 %s204, 1
      %p208 = scmp.eq.s32.totalorder %s23, 1
      %p209 = scmp.ne.s32.totalorder %s204, %s206
      %p210 = scmp.eq.s32.totalorder %s23, 0
      %p211 = por %p209, %p210
      %p212 = scmp.ne.s32.totalorder %s204, %s206
      %p213 = scmp.eq.s32.totalorder %s28, 1
      %p214 = por %p212, %p213
      %p215 = scmp.ne.s32.totalorder %s206, %s207
      %p216 = scmp.eq.s32.totalorder %s28, 0
      %p217 = por %p215, %p216
      %p218 = scmp.ne.s32.totalorder %s206, %s207
      %p219 = scmp.eq.s32.totalorder %s29, 1
      %p220 = por %p218, %p219
      %p222 = scmp.ne.s32.totalorder %s207, %s221
      %p223 = scmp.eq.s32.totalorder %s29, 0
      %p224 = por %p222, %p223
      %s225 = ssub.s32 %s23, %s30
      %p226 = scmp.eq.s32.totalorder %s225, 0
      %s228 = sadd.s32 %s227, 1
      %s229 = scalar_select %p226, %s227, %s228
      %p232 = pneg %p226
      %p233 = scmp.eq.s32.totalorder %s23, 1
      %p234 = por %p232, %p233
      %p235 = scmp.ne.s32.totalorder %s227, %s230
      %p236 = scmp.eq.s32.totalorder %s23, 0
      %p237 = por %p235, %p236
      %p238 = scmp.ne.s32.totalorder %s227, %s230
      %p239 = scmp.eq.s32.totalorder %s28, 1
      %p240 = por %p238, %p239
      %p241 = scmp.ne.s32.totalorder %s230, %s231
      %p242 = scmp.eq.s32.totalorder %s28, 0
      %p243 = por %p241, %p242
      %p244 = scmp.ne.s32.totalorder %s230, %s231
      %p245 = scmp.eq.s32.totalorder %s29, 1
      %p246 = por %p244, %p245
      %p248 = scmp.ne.s32.totalorder %s231, %s247
      %p249 = scmp.eq.s32.totalorder %s29, 0
      %p250 = por %p248, %p249
      %p251 = scmp.le.s32.totalorder 1, %s23
      %p252 = scmp.lt.s32.totalorder %s23, 3
      %p253 = pnand %p251, %p252
      %p254 = pneg %p253
      // Predicated region
      $region9: #{tpu_custom_call.1} parent=5 // pred_check
        _
      $region10: #{tpu_custom_call.1} parent=5 // pred_check_branch
        %256 = sbr.rel (%p253) target = $region12
      $region11: #{tpu_custom_call.1} parent=5 // pred_region
        %s257 = ssub.s32 %s23, 1
        // Predicated region
        $region13: #{tpu_custom_call.1} parent=11 // pred_check
          %p258 = pneg %p70
        $region14: #{tpu_custom_call.1} parent=11 // pred_check_branch
          %260 = sbr.rel (%p258) target = $region16
        $region15: #{tpu_custom_call.1} parent=11 // pred_region
          %s262 = ssub.s32 256, 256
          %263 = vsyncadd [#allocation6], %s262
          %s264 = sshll.u32 [#allocation5], 4
          %s265 = int_to_ptr.vmem [resolvable:$true] %s264
          %270 = dma.hbm_to_vmem [thread:$0]  %s1, 256, %s265, [#allocation6], 64, 64, 4
        $region16: #{tpu_custom_call.1} parent=11 // pred_fallthru
          _
        // Predicated region
        $region17: #{tpu_custom_call.1} parent=11 // pred_check
          %p271 = pneg %p91
        $region18: #{tpu_custom_call.1} parent=11 // pred_check_branch
          %273 = sbr.rel (%p271) target = $region20
        $region19: #{tpu_custom_call.1} parent=11 // pred_region
          _
        $region20: #{tpu_custom_call.1} parent=11 // pred_fallthru
          _
        // Predicated region
        $region21: #{tpu_custom_call.1} parent=11 // pred_check
          %p274 = pneg %p112
        $region22: #{tpu_custom_call.1} parent=11 // pred_check_branch
          %276 = sbr.rel (%p274) target = $region24
        $region23: #{tpu_custom_call.1} parent=11 // pred_region
          %s278 = ssub.s32 1024, 1024
          %279 = vsyncadd [#allocation6], %s278
          %s280 = sshll.u32 [#allocation7], 4
          %s281 = int_to_ptr.vmem [resolvable:$true] %s280
          %286 = dma.hbm_to_vmem [thread:$0]  %s3, 1024, %s281, [#allocation6], 64, 64, 4
        $region24: #{tpu_custom_call.1} parent=11 // pred_fallthru
          _
        // Predicated region
        $region25: #{tpu_custom_call.1} parent=11 // pred_check
          %p287 = pneg %p133
        $region26: #{tpu_custom_call.1} parent=11 // pred_check_branch
          %289 = sbr.rel (%p287) target = $region28
        $region27: #{tpu_custom_call.1} parent=11 // pred_region
          _
        $region28: #{tpu_custom_call.1} parent=11 // pred_fallthru
          _
        // Predicated region
        $region29: #{tpu_custom_call.1} parent=11 // pred_check
          %p290 = pneg %p154
        $region30: #{tpu_custom_call.1} parent=11 // pred_check_branch
          %292 = sbr.rel (%p290) target = $region32
        $region31: #{tpu_custom_call.1} parent=11 // pred_region
          %s294 = ssub.s32 1024, 1024
          %295 = vsyncadd [#allocation9], %s294
          %s296 = sshll.u32 [#allocation8], 4
          %s297 = int_to_ptr.vmem [resolvable:$true] %s296
          %302 = dma.hbm_to_vmem [thread:$0]  %s5, 1024, %s297, [#allocation9], 64, 64, 4
        $region32: #{tpu_custom_call.1} parent=11 // pred_fallthru
          _
        // Predicated region
        $region33: #{tpu_custom_call.1} parent=11 // pred_check
          %p303 = pneg %p175
        $region34: #{tpu_custom_call.1} parent=11 // pred_check_branch
          %305 = sbr.rel (%p303) target = $region36
        $region35: #{tpu_custom_call.1} parent=11 // pred_region
          _
        $region36: #{tpu_custom_call.1} parent=11 // pred_fallthru
          _
        // Predicated region
        $region37: #{tpu_custom_call.1} parent=11 // pred_check
          %p306 = pneg %p196
        $region38: #{tpu_custom_call.1} parent=11 // pred_check_branch
          %308 = sbr.rel (%p306) target = $region40
        $region39: #{tpu_custom_call.1} parent=11 // pred_region
          %s310 = ssub.s32 1024, 1024
          %311 = vsyncadd [#allocation9], %s310
          %s312 = sshll.u32 [#allocation10], 4
          %s313 = int_to_ptr.vmem [resolvable:$true] %s312
          %318 = dma.hbm_to_vmem [thread:$0]  %s7, 1024, %s313, [#allocation9], 64, 64, 4
        $region40: #{tpu_custom_call.1} parent=11 // pred_fallthru
          _
        // Predicated region
        $region41: #{tpu_custom_call.1} parent=11 // pred_check
          %p319 = pneg %p217
        $region42: #{tpu_custom_call.1} parent=11 // pred_check_branch
          %321 = sbr.rel (%p319) target = $region44
        $region43: #{tpu_custom_call.1} parent=11 // pred_region
          _
        $region44: #{tpu_custom_call.1} parent=11 // pred_fallthru
          _
      $region12: #{tpu_custom_call.1} parent=5 // pred_fallthru
        _
      %p322 = scmp.lt.s32.totalorder %s23, 2
      // Predicated region
      $region45: #{tpu_custom_call.1} parent=5 // pred_check
        %p323 = pneg %p322
      $region46: #{tpu_custom_call.1} parent=5 // pred_check_branch
        %325 = sbr.rel (%p323) target = $region48
      $region47: #{tpu_custom_call.1} parent=5 // pred_region
        // Predicated region
        $region49: #{tpu_custom_call.1} parent=47 // pred_check
          %p326 = pneg %p43
        $region50: #{tpu_custom_call.1} parent=47 // pred_check_branch
          %328 = sbr.rel (%p326) target = $region52
        $region51: #{tpu_custom_call.1} parent=47 // pred_region
          %s329 = sand.u32 %s33, 1
          %s330 = scalar_lea.sflag [#allocation3], %s329
          %s331 = sand.u32 %s33, 1
          %s332 = smul.addr %s331, 8
          %s333 = scalar_lea.vmem [#allocation2], %s332
          %s334 = smul.u32 2, %s23
          %s336 = ssub.s32 128, 128
          %337 = vsyncadd %s330, %s336
          %s338 = smul.addr %s334, 64
          %s339 = scalar_lea.hbm %s0, %s338
          %s340 = sshll.u32 %s333, 4
          %s341 = int_to_ptr.vmem [resolvable:$true] %s340
          %346 = dma.hbm_to_vmem [thread:$0]  %s339, 128, %s341, %s330, 64, 64, 4
        $region52: #{tpu_custom_call.1} parent=47 // pred_fallthru
          _
      $region48: #{tpu_custom_call.1} parent=5 // pred_fallthru
        _
      %p347 = scmp.le.s32.totalorder 1, %s23
      %p348 = scmp.lt.s32.totalorder %s23, 3
      %p349 = pnand %p347, %p348
      %p350 = pneg %p349
      // Predicated region
      $region53: #{tpu_custom_call.1} parent=5 // pred_check
        _
      $region54: #{tpu_custom_call.1} parent=5 // pred_check_branch
        %352 = sbr.rel (%p349) target = $region56
      $region55: #{tpu_custom_call.1} parent=5 // pred_region
        %s353 = ssub.s32 %s23, 1
        %s354 = sand.u32 %s36, 1
        %s355 = scalar_lea.sflag [#allocation3], %s354
        %s356 = sand.u32 %s36, 1
        %s357 = smul.addr %s356, 8
        %s358 = scalar_lea.vmem [#allocation2], %s357
        // Predicated region
        $region57: #{tpu_custom_call.1} parent=55 // pred_check
          %p359 = pneg %p49
        $region58: #{tpu_custom_call.1} parent=55 // pred_check_branch
          %361 = sbr.rel (%p359) target = $region60
        $region59: #{tpu_custom_call.1} parent=55 // pred_region
          %362 = dma.done %s355, 128
        $region60: #{tpu_custom_call.1} parent=55 // pred_fallthru
          _
        // Predicated region
        $region61: #{tpu_custom_call.1} parent=55 // pred_check
          %p363 = pneg %p70
        $region62: #{tpu_custom_call.1} parent=55 // pred_check_branch
          %365 = sbr.rel (%p363) target = $region64
        $region63: #{tpu_custom_call.1} parent=55 // pred_region
          %366 = dma.done [#allocation6], 256
        $region64: #{tpu_custom_call.1} parent=55 // pred_fallthru
          _
        // Predicated region
        $region65: #{tpu_custom_call.1} parent=55 // pred_check
          %p367 = pneg %p112
        $region66: #{tpu_custom_call.1} parent=55 // pred_check_branch
          %369 = sbr.rel (%p367) target = $region68
        $region67: #{tpu_custom_call.1} parent=55 // pred_region
          %370 = dma.done [#allocation6], 1024
        $region68: #{tpu_custom_call.1} parent=55 // pred_fallthru
          _
        // Predicated region
        $region69: #{tpu_custom_call.1} parent=55 // pred_check
          %p371 = pneg %p154
        $region70: #{tpu_custom_call.1} parent=55 // pred_check_branch
          %373 = sbr.rel (%p371) target = $region72
        $region71: #{tpu_custom_call.1} parent=55 // pred_region
          %374 = dma.done [#allocation9], 1024
        $region72: #{tpu_custom_call.1} parent=55 // pred_fallthru
          _
        // Predicated region
        $region73: #{tpu_custom_call.1} parent=55 // pred_check
          %p375 = pneg %p196
        $region74: #{tpu_custom_call.1} parent=55 // pred_check_branch
          %377 = sbr.rel (%p375) target = $region76
        $region75: #{tpu_custom_call.1} parent=55 // pred_region
          %378 = dma.done [#allocation9], 1024
        $region76: #{tpu_custom_call.1} parent=55 // pred_fallthru
          _
        %s379 = sand.u32 %s36, 1
        %s380 = scalar_lea.sflag [#allocation3], %s379
        %s381 = sand.u32 %s36, 1
        %s382 = smul.addr %s381, 8
        %s383 = scalar_lea.vmem [#allocation2], %s382
        %p384 = pneg %p49
        %p385 = pneg %p46
        %p386 = pneg %p70
        %p387 = pneg %p67
        %p388 = pneg %p91
        %p389 = pneg %p88
        %p390 = pneg %p112
        %p391 = pneg %p109
        %p392 = pneg %p133
        %p393 = pneg %p130
        %p394 = pneg %p154
        %p395 = pneg %p151
        %p396 = pneg %p175
        %p397 = pneg %p172
        %p398 = pneg %p196
        %p399 = pneg %p193
        %p400 = pneg %p217
        %p401 = pneg %p214
        %p402 = pneg %p243
        %p403 = pneg %p240
        %s404 = sand.u32 %s230, 1
        %s405 = scalar_lea.sflag [#allocation4], %s404
        %s406 = sand.u32 %s230, 1
        %s407 = smul.addr %s406, 8
        %s408 = scalar_lea.vmem [#allocation11], %s407
        %s409 = smul.u32 2, %s28
        %s410 = smul.u32 2, %s28
        %v412 = vld [vmem:[%s358] sm:$0xf]
        %v413 = vld [vmem:[%s358 + $0x4] sm:$0xf]
        %v414 = vld [vmem:[#allocation5] sm:$0xf]
        %v415 = vld [vmem:[#allocation5 + $0x4] sm:$0xf]
        %v416 = vld [vmem:[#allocation5 + $0x8] sm:$0xf]
        %v417 = vld [vmem:[#allocation5 + $0xc] sm:$0xf]
        %v418 = vld [vmem:[%s2] sm:$0x1]
        %v420 = vlaneseq
        %v421 = vshrl.u32 %v420, 7
        %v422 = vsub.s32 0, %v421
        %v423 = vrot.slane %v418, %v422
        %v427 = vunpack.c.l.b16 %v412
        %v428 = vunpack.c.l.b16 %v413
        %v429 = vpack.c.b16 %v428, %v427
        %v434 = vunpack.c.l.b16 %v414
        %v435 = vunpack.c.l.b16 %v415
        %v436 = vunpack.c.l.b16 %v416
        %v437 = vunpack.c.l.b16 %v417
        %v438 = vpack.c.b16 %v435, %v434
        %v439 = vpack.c.b16 %v437, %v436
        %vm442 = vcmask 261120
        %v444 = vsel %vm442, %v429, 0
        %446 = vmatprep.subr.bf16.mxu0 0
        %447 = vmatpush1.bf16.msra.mxu0 %v438
        %448 = vmatprep.subr.bf16.mxu0 0
        %449 = vmatpush1.bf16.msra.mxu0 %v439
        %450 = vmatprep.subr.bf16.mxu0 0
        %451 = vmatpush1.bf16.msra.mxu0 0
        %452 = vmatprep.subr.bf16.mxu0 0
        %453 = vmatpush1.bf16.msra.mxu0 0
        %454 = vmatprep.subr.bf16.mxu0 0
        %455 = vmatpush1.bf16.msra.mxu0 0
        %456 = vmatprep.subr.bf16.mxu0 0
        %457 = vmatpush1.bf16.msra.mxu0 0
        %458 = vmatprep.subr.bf16.mxu0 0
        %459 = vmatpush1.bf16.msra.mxu0 0
        %460 = vmatprep.subr.bf16.mxu0 0
        %461 = vmatpush1.bf16.msra.mxu0 0
        %462 = vmatprep.subr.bf16.mxu0 0
        %463 = vmatpush1.bf16.msra.mxu0 0
        %464 = vmatprep.subr.bf16.mxu0 0
        %465 = vmatpush1.bf16.msra.mxu0 0
        %466 = vmatprep.subr.bf16.mxu0 0
        %467 = vmatpush1.bf16.msra.mxu0 0
        %468 = vmatprep.subr.bf16.mxu0 0
        %469 = vmatpush1.bf16.msra.mxu0 0
        %470 = vmatprep.subr.bf16.mxu0 0
        %471 = vmatpush1.bf16.msra.mxu0 0
        %472 = vmatprep.subr.bf16.mxu0 0
        %473 = vmatpush1.bf16.msra.mxu0 0
        %474 = vmatprep.subr.bf16.mxu0 0
        %475 = vmatpush1.bf16.msra.mxu0 0
        %476 = vmatprep.subr.bf16.mxu0 0
        %477 = vmatpush1.bf16.msra.mxu0 0
        %478 = vmatprep.mubr.bf16.mxu0 0
        %479 = vmatmul.mubr.bf16.gmra.mrb[0].mxu0 %v444
        %v480 = vpop.f32.mrb[0].mxu0
        %v481 = vadd.f32 %v423, %v480
        %v482 = vpop.f32.mrb[0].mxu0
        %v483 = vpop.f32.mrb[0].mxu0
        %v484 = vadd.f32 %v423, %v483
        %v485 = vpop.f32.mrb[0].mxu0
        %486 = vdwg.mxu0
        %v487 = vmax.f32 %v481, 0.0
        %v488 = vmax.f32 %v484, 0.0
        %v489 = vpack.c.bf16 %v488, %v487
        %v490 = vld [vmem:[#allocation7] sm:$0xf]
        %v491 = vld [vmem:[#allocation7 + $0x4] sm:$0xf]
        %v492 = vld [vmem:[#allocation7 + $0x8] sm:$0xf]
        %v493 = vld [vmem:[#allocation7 + $0xc] sm:$0xf]
        %v494 = vld [vmem:[#allocation7 + $0x10] sm:$0xf]
        %v495 = vld [vmem:[#allocation7 + $0x14] sm:$0xf]
        %v496 = vld [vmem:[#allocation7 + $0x18] sm:$0xf]
        %v497 = vld [vmem:[#allocation7 + $0x1c] sm:$0xf]
        %v498 = vld [vmem:[#allocation7 + $0x20] sm:$0xf]
        %v499 = vld [vmem:[#allocation7 + $0x24] sm:$0xf]
        %v500 = vld [vmem:[#allocation7 + $0x28] sm:$0xf]
        %v501 = vld [vmem:[#allocation7 + $0x2c] sm:$0xf]
        %v502 = vld [vmem:[#allocation7 + $0x30] sm:$0xf]
        %v503 = vld [vmem:[#allocation7 + $0x34] sm:$0xf]
        %v504 = vld [vmem:[#allocation7 + $0x38] sm:$0xf]
        %v505 = vld [vmem:[#allocation7 + $0x3c] sm:$0xf]
        %v506 = vld [vmem:[%s4] sm:$0x1]
        %v508 = vlaneseq
        %v509 = vshrl.u32 %v508, 7
        %v510 = vsub.s32 0, %v509
        %v511 = vrot.slane %v506, %v510
        %v529 = vunpack.c.l.b16 %v490
        %v530 = vunpack.c.l.b16 %v491
        %v531 = vunpack.c.l.b16 %v492
        %v532 = vunpack.c.l.b16 %v493
        %v533 = vunpack.c.l.b16 %v494
        %v534 = vunpack.c.l.b16 %v495
        %v535 = vunpack.c.l.b16 %v496
        %v536 = vunpack.c.l.b16 %v497
        %v537 = vunpack.c.l.b16 %v498
        %v538 = vunpack.c.l.b16 %v499
        %v539 = vunpack.c.l.b16 %v500
        %v540 = vunpack.c.l.b16 %v501
        %v541 = vunpack.c.l.b16 %v502
        %v542 = vunpack.c.l.b16 %v503
        %v543 = vunpack.c.l.b16 %v504
        %v544 = vunpack.c.l.b16 %v505
        %v545 = vpack.c.b16 %v530, %v529
        %v546 = vpack.c.b16 %v532, %v531
        %v547 = vpack.c.b16 %v534, %v533
        %v548 = vpack.c.b16 %v536, %v535
        %v549 = vpack.c.b16 %v538, %v537
        %v550 = vpack.c.b16 %v540, %v539
        %v551 = vpack.c.b16 %v542, %v541
        %v552 = vpack.c.b16 %v544, %v543
        %561 = vmatprep.subr.bf16.mxu0 0
        %562 = vmatpush1.bf16.msra.mxu0 %v545
        %563 = vmatprep.subr.bf16.mxu0 0
        %564 = vmatpush1.bf16.msra.mxu0 %v546
        %565 = vmatprep.subr.bf16.mxu0 0
        %566 = vmatpush1.bf16.msra.mxu0 %v547
        %567 = vmatprep.subr.bf16.mxu0 0
        %568 = vmatpush1.bf16.msra.mxu0 %v548
        %569 = vmatprep.subr.bf16.mxu0 0
        %570 = vmatpush1.bf16.msra.mxu0 %v549
        %571 = vmatprep.subr.bf16.mxu0 0
        %572 = vmatpush1.bf16.msra.mxu0 %v550
        %573 = vmatprep.subr.bf16.mxu0 0
        %574 = vmatpush1.bf16.msra.mxu0 %v551
        %575 = vmatprep.subr.bf16.mxu0 0
        %576 = vmatpush1.bf16.msra.mxu0 %v552
        %577 = vmatprep.subr.bf16.mxu0 0
        %578 = vmatpush1.bf16.msra.mxu0 0
        %579 = vmatprep.subr.bf16.mxu0 0
        %580 = vmatpush1.bf16.msra.mxu0 0
        %581 = vmatprep.subr.bf16.mxu0 0
        %582 = vmatpush1.bf16.msra.mxu0 0
        %583 = vmatprep.subr.bf16.mxu0 0
        %584 = vmatpush1.bf16.msra.mxu0 0
        %585 = vmatprep.subr.bf16.mxu0 0
        %586 = vmatpush1.bf16.msra.mxu0 0
        %587 = vmatprep.subr.bf16.mxu0 0
        %588 = vmatpush1.bf16.msra.mxu0 0
        %589 = vmatprep.subr.bf16.mxu0 0
        %590 = vmatpush1.bf16.msra.mxu0 0
        %591 = vmatprep.subr.bf16.mxu0 0
        %592 = vmatpush1.bf16.msra.mxu0 0
        %593 = vmatprep.mubr.bf16.mxu0 0
        %594 = vmatmul.mubr.bf16.gmra.mrb[0].mxu0 %v489
        %v595 = vpop.f32.mrb[0].mxu0
        %v596 = vadd.f32 %v511, %v595
        %v597 = vpop.f32.mrb[0].mxu0
        %v598 = vpop.f32.mrb[0].mxu0
        %v599 = vadd.f32 %v511, %v598
        %v600 = vpop.f32.mrb[0].mxu0
        %601 = vdwg.mxu0
        %v602 = vmax.f32 %v596, 0.0
        %v603 = vmax.f32 %v599, 0.0
        %v604 = vpack.c.bf16 %v603, %v602
        %v605 = vld [vmem:[#allocation8] sm:$0xf]
        %v606 = vld [vmem:[#allocation8 + $0x4] sm:$0xf]
        %v607 = vld [vmem:[#allocation8 + $0x8] sm:$0xf]
        %v608 = vld [vmem:[#allocation8 + $0xc] sm:$0xf]
        %v609 = vld [vmem:[#allocation8 + $0x10] sm:$0xf]
        %v610 = vld [vmem:[#allocation8 + $0x14] sm:$0xf]
        %v611 = vld [vmem:[#allocation8 + $0x18] sm:$0xf]
        %v612 = vld [vmem:[#allocation8 + $0x1c] sm:$0xf]
        %v613 = vld [vmem:[#allocation8 + $0x20] sm:$0xf]
        %v614 = vld [vmem:[#allocation8 + $0x24] sm:$0xf]
        %v615 = vld [vmem:[#allocation8 + $0x28] sm:$0xf]
        %v616 = vld [vmem:[#allocation8 + $0x2c] sm:$0xf]
        %v617 = vld [vmem:[#allocation8 + $0x30] sm:$0xf]
        %v618 = vld [vmem:[#allocation8 + $0x34] sm:$0xf]
        %v619 = vld [vmem:[#allocation8 + $0x38] sm:$0xf]
        %v620 = vld [vmem:[#allocation8 + $0x3c] sm:$0xf]
        %v621 = vld [vmem:[%s6] sm:$0x1]
        %v623 = vlaneseq
        %v624 = vshrl.u32 %v623, 7
        %v625 = vsub.s32 0, %v624
        %v626 = vrot.slane %v621, %v625
        %v644 = vunpack.c.l.b16 %v605
        %v645 = vunpack.c.l.b16 %v606
        %v646 = vunpack.c.l.b16 %v607
        %v647 = vunpack.c.l.b16 %v608
        %v648 = vunpack.c.l.b16 %v609
        %v649 = vunpack.c.l.b16 %v610
        %v650 = vunpack.c.l.b16 %v611
        %v651 = vunpack.c.l.b16 %v612
        %v652 = vunpack.c.l.b16 %v613
        %v653 = vunpack.c.l.b16 %v614
        %v654 = vunpack.c.l.b16 %v615
        %v655 = vunpack.c.l.b16 %v616
        %v656 = vunpack.c.l.b16 %v617
        %v657 = vunpack.c.l.b16 %v618
        %v658 = vunpack.c.l.b16 %v619
        %v659 = vunpack.c.l.b16 %v620
        %v660 = vpack.c.b16 %v645, %v644
        %v661 = vpack.c.b16 %v647, %v646
        %v662 = vpack.c.b16 %v649, %v648
        %v663 = vpack.c.b16 %v651, %v650
        %v664 = vpack.c.b16 %v653, %v652
        %v665 = vpack.c.b16 %v655, %v654
        %v666 = vpack.c.b16 %v657, %v656
        %v667 = vpack.c.b16 %v659, %v658
        %676 = vmatprep.subr.bf16.mxu0 0
        %677 = vmatpush1.bf16.msra.mxu0 %v660
        %678 = vmatprep.subr.bf16.mxu0 0
        %679 = vmatpush1.bf16.msra.mxu0 %v661
        %680 = vmatprep.subr.bf16.mxu0 0
        %681 = vmatpush1.bf16.msra.mxu0 %v662
        %682 = vmatprep.subr.bf16.mxu0 0
        %683 = vmatpush1.bf16.msra.mxu0 %v663
        %684 = vmatprep.subr.bf16.mxu0 0
        %685 = vmatpush1.bf16.msra.mxu0 %v664
        %686 = vmatprep.subr.bf16.mxu0 0
        %687 = vmatpush1.bf16.msra.mxu0 %v665
        %688 = vmatprep.subr.bf16.mxu0 0
        %689 = vmatpush1.bf16.msra.mxu0 %v666
        %690 = vmatprep.subr.bf16.mxu0 0
        %691 = vmatpush1.bf16.msra.mxu0 %v667
        %692 = vmatprep.subr.bf16.mxu0 0
        %693 = vmatpush1.bf16.msra.mxu0 0
        %694 = vmatprep.subr.bf16.mxu0 0
        %695 = vmatpush1.bf16.msra.mxu0 0
        %696 = vmatprep.subr.bf16.mxu0 0
        %697 = vmatpush1.bf16.msra.mxu0 0
        %698 = vmatprep.subr.bf16.mxu0 0
        %699 = vmatpush1.bf16.msra.mxu0 0
        %700 = vmatprep.subr.bf16.mxu0 0
        %701 = vmatpush1.bf16.msra.mxu0 0
        %702 = vmatprep.subr.bf16.mxu0 0
        %703 = vmatpush1.bf16.msra.mxu0 0
        %704 = vmatprep.subr.bf16.mxu0 0
        %705 = vmatpush1.bf16.msra.mxu0 0
        %706 = vmatprep.subr.bf16.mxu0 0
        %707 = vmatpush1.bf16.msra.mxu0 0
        %708 = vmatprep.mubr.bf16.mxu0 0
        %709 = vmatmul.mubr.bf16.gmra.mrb[0].mxu0 %v604
        %v710 = vpop.f32.mrb[0].mxu0
        %v711 = vadd.f32 %v626, %v710
        %v712 = vpop.f32.mrb[0].mxu0
        %v713 = vpop.f32.mrb[0].mxu0
        %v714 = vadd.f32 %v626, %v713
        %v715 = vpop.f32.mrb[0].mxu0
        %716 = vdwg.mxu0
        %v717 = vmax.f32 %v711, 0.0
        %v718 = vmax.f32 %v714, 0.0
        %v719 = vpack.c.bf16 %v718, %v717
        %v720 = vld [vmem:[#allocation10] sm:$0xf]
        %v721 = vld [vmem:[#allocation10 + $0x4] sm:$0xf]
        %v722 = vld [vmem:[#allocation10 + $0x8] sm:$0xf]
        %v723 = vld [vmem:[#allocation10 + $0xc] sm:$0xf]
        %v724 = vld [vmem:[#allocation10 + $0x10] sm:$0xf]
        %v725 = vld [vmem:[#allocation10 + $0x14] sm:$0xf]
        %v726 = vld [vmem:[#allocation10 + $0x18] sm:$0xf]
        %v727 = vld [vmem:[#allocation10 + $0x1c] sm:$0xf]
        %v728 = vld [vmem:[#allocation10 + $0x20] sm:$0xf]
        %v729 = vld [vmem:[#allocation10 + $0x24] sm:$0xf]
        %v730 = vld [vmem:[#allocation10 + $0x28] sm:$0xf]
        %v731 = vld [vmem:[#allocation10 + $0x2c] sm:$0xf]
        %v732 = vld [vmem:[#allocation10 + $0x30] sm:$0xf]
        %v733 = vld [vmem:[#allocation10 + $0x34] sm:$0xf]
        %v734 = vld [vmem:[#allocation10 + $0x38] sm:$0xf]
        %v735 = vld [vmem:[#allocation10 + $0x3c] sm:$0xf]
        %v736 = vld [vmem:[%s8] sm:$0x1]
        %v738 = vlaneseq
        %v739 = vshrl.u32 %v738, 7
        %v740 = vsub.s32 0, %v739
        %v741 = vrot.slane %v736, %v740
        %v759 = vunpack.c.l.b16 %v720
        %v760 = vunpack.c.l.b16 %v721
        %v761 = vunpack.c.l.b16 %v722
        %v762 = vunpack.c.l.b16 %v723
        %v763 = vunpack.c.l.b16 %v724
        %v764 = vunpack.c.l.b16 %v725
        %v765 = vunpack.c.l.b16 %v726
        %v766 = vunpack.c.l.b16 %v727
        %v767 = vunpack.c.l.b16 %v728
        %v768 = vunpack.c.l.b16 %v729
        %v769 = vunpack.c.l.b16 %v730
        %v770 = vunpack.c.l.b16 %v731
        %v771 = vunpack.c.l.b16 %v732
        %v772 = vunpack.c.l.b16 %v733
        %v773 = vunpack.c.l.b16 %v734
        %v774 = vunpack.c.l.b16 %v735
        %v775 = vpack.c.b16 %v760, %v759
        %v776 = vpack.c.b16 %v762, %v761
        %v777 = vpack.c.b16 %v764, %v763
        %v778 = vpack.c.b16 %v766, %v765
        %v779 = vpack.c.b16 %v768, %v767
        %v780 = vpack.c.b16 %v770, %v769
        %v781 = vpack.c.b16 %v772, %v771
        %v782 = vpack.c.b16 %v774, %v773
        %791 = vmatprep.subr.bf16.mxu0 0
        %792 = vmatpush1.bf16.msra.mxu0 %v775
        %793 = vmatprep.subr.bf16.mxu0 0
        %794 = vmatpush1.bf16.msra.mxu0 %v776
        %795 = vmatprep.subr.bf16.mxu0 0
        %796 = vmatpush1.bf16.msra.mxu0 %v777
        %797 = vmatprep.subr.bf16.mxu0 0
        %798 = vmatpush1.bf16.msra.mxu0 %v778
        %799 = vmatprep.subr.bf16.mxu0 0
        %800 = vmatpush1.bf16.msra.mxu0 %v779
        %801 = vmatprep.subr.bf16.mxu0 0
        %802 = vmatpush1.bf16.msra.mxu0 %v780
        %803 = vmatprep.subr.bf16.mxu0 0
        %804 = vmatpush1.bf16.msra.mxu0 %v781
        %805 = vmatprep.subr.bf16.mxu0 0
        %806 = vmatpush1.bf16.msra.mxu0 %v782
        %807 = vmatprep.subr.bf16.mxu0 0
        %808 = vmatpush1.bf16.msra.mxu0 0
        %809 = vmatprep.subr.bf16.mxu0 0
        %810 = vmatpush1.bf16.msra.mxu0 0
        %811 = vmatprep.subr.bf16.mxu0 0
        %812 = vmatpush1.bf16.msra.mxu0 0
        %813 = vmatprep.subr.bf16.mxu0 0
        %814 = vmatpush1.bf16.msra.mxu0 0
        %815 = vmatprep.subr.bf16.mxu0 0
        %816 = vmatpush1.bf16.msra.mxu0 0
        %817 = vmatprep.subr.bf16.mxu0 0
        %818 = vmatpush1.bf16.msra.mxu0 0
        %819 = vmatprep.subr.bf16.mxu0 0
        %820 = vmatpush1.bf16.msra.mxu0 0
        %821 = vmatprep.subr.bf16.mxu0 0
        %822 = vmatpush1.bf16.msra.mxu0 0
        %823 = vmatprep.mubr.bf16.mxu0 0
        %824 = vmatmul.mubr.bf16.gmra.mrb[0].mxu0 %v719
        %v825 = vpop.f32.mrb[0].mxu0
        %v826 = vadd.f32 %v741, %v825
        %v827 = vpop.f32.mrb[0].mxu0
        %v828 = vpop.f32.mrb[0].mxu0
        %v829 = vadd.f32 %v741, %v828
        %v830 = vpop.f32.mrb[0].mxu0
        %831 = vdwg.mxu0
        %832 = vmax.xlane.f32.xlu0 %v826
        %v833 = vpop.xlane.xlu0 %832
        %834 = vmax.xlane.f32.xlu0 %v829
        %v835 = vpop.xlane.xlu0 %834
        %v836 = vsub.f32 %v826, %v833
        %v837 = vsub.f32 %v829, %v835
        %v838 = vmul.f32 %v836, 1.442695
        %v839 = vpow.pop %v838
        %v840 = vmul.f32 %v837, 1.442695
        %v841 = vpow.pop %v840
        %842 = vadd.xlane.f32.xlu0 %v839
        %v843 = vpop.xlane.xlu0 %842
        %844 = vadd.xlane.f32.xlu0 %v841
        %v845 = vpop.xlane.xlu0 %844
        %v846 = vrcp.pop %v843
        %v847 = vmul.f32 %v839, %v846
        %v848 = vrcp.pop %v845
        %v849 = vmul.f32 %v841, %v848
        %v850 = vpack.c.bf16 %v849, %v847
        %v852 = vunpack.c.l.b16 %v850
        %v853 = vunpack.c.h.b16 %v850
        %v854 = vpack.c.b16 %v852, %v852
        %v855 = vpack.c.b16 %v853, %v853
        %858 = vst [vmem:[%s408] sm:$0xf] %v854
        %859 = vst [vmem:[%s408 + $0x4] sm:$0xf] %v855
        %s860 = sand.u32 %s230, 1
        %s861 = scalar_lea.sflag [#allocation4], %s860
        %s862 = sand.u32 %s230, 1
        %s863 = smul.addr %s862, 8
        %s864 = scalar_lea.vmem [#allocation11], %s863
        // Predicated region
        $region77: #{tpu_custom_call.1} parent=55 // pred_check
          %p865 = pneg %p240
        $region78: #{tpu_custom_call.1} parent=55 // pred_check_branch
          %867 = sbr.rel (%p865) target = $region80
        $region79: #{tpu_custom_call.1} parent=55 // pred_region
          %s868 = smul.u32 2, %s28
          %s870 = ssub.s32 128, 128
          %871 = vsyncadd %s861, %s870
          %s872 = smul.addr %s868, 64
          %s873 = scalar_lea.hbm %s9, %s872
          %s874 = sshll.u32 %s864, 4
          %s875 = int_to_ptr.vmem [resolvable:$true] %s874
          %880 = dma.vmem_to_hbm [thread:$0]  %s875, 128, %s873, %s861, 64, 64, 4
        $region80: #{tpu_custom_call.1} parent=55 // pred_fallthru
          _
      $region56: #{tpu_custom_call.1} parent=5 // pred_fallthru
        _
      %p881 = scmp.le.s32.totalorder 2, %s23
      // Predicated region
      $region81: #{tpu_custom_call.1} parent=5 // pred_check
        %p882 = pneg %p881
      $region82: #{tpu_custom_call.1} parent=5 // pred_check_branch
        %884 = sbr.rel (%p882) target = $region84
      $region83: #{tpu_custom_call.1} parent=5 // pred_region
        %s885 = ssub.s32 %s23, 2
        // Predicated region
        $region85: #{tpu_custom_call.1} parent=83 // pred_check
          %p886 = pneg %p246
        $region86: #{tpu_custom_call.1} parent=83 // pred_check_branch
          %888 = sbr.rel (%p886) target = $region88
        $region87: #{tpu_custom_call.1} parent=83 // pred_region
          %s889 = sand.u32 %s231, 1
          %s890 = scalar_lea.sflag [#allocation4], %s889
          %s891 = sand.u32 %s231, 1
          %s892 = smul.addr %s891, 8
          %s893 = scalar_lea.vmem [#allocation11], %s892
          %894 = dma.done %s890, 128
        $region88: #{tpu_custom_call.1} parent=83 // pred_fallthru
          _
      $region84: #{tpu_custom_call.1} parent=5 // pred_fallthru
        _
    $region6: #{tpu_custom_call.1} parent=1 // loop_footer
      %s27 = sadd.s32 1, %s23
    $region7: #{tpu_custom_call.1} parent=1 // loop_footer_branch
      %22 = sbr.rel target = $region3
    $region8: #{tpu_custom_call.1} parent=1 // loop_exit
      _
    %895 = vsyncpa [#allocation3], 1
    %s896 = scalar_lea.sflag [#allocation3], 1
    %897 = vsyncpa %s896, 1
    %898 = vsyncpa [#allocation6], 1
    %899 = vsyncpa [#allocation9], 1
    %900 = vsyncpa [#allocation4], 1
    %s901 = scalar_lea.sflag [#allocation4], 1
    %902 = vsyncpa %s901, 1

</llo_original>
